<compile_context>
chip_gen: v5e
topology: v5e:2x2
jax: 0.10.0
libtpu: 0.0.40
codegen_flags: <defaults>
</compile_context>

<pallas_src>
import math
import jax
import jax.numpy as jnp
from jax import lax
from jax.experimental import pallas as pl
from jax.experimental.pallas import tpu as pltpu

# ---- problem sizes (small, consistent with the module) --------------------
B        = 2           # graphs per batch (padded, per-graph slabs)
N        = 16          # nodes per graph
D_IN     = 32          # in_channels
D_OUT    = 1           # out_dim of scoring HGT (SAG pooling => scalar score)
T        = 2           # num_types
R        = 2           # num_relations
H        = 1           # n_heads (fixed to 1 by MySAGPooling)
DK       = D_OUT // H  # = 1
E        = 48          # edges per graph
RATIO    = 0.5
SQRT_DK  = math.sqrt(DK)
LANES    = 128         # lane-dense output width
N_GROUPS = 4           # fused input-side linears per type: [K, Q, V, Mapping]
M_ROWS   = max(E, N)   # rows of the packed int32 meta slab


def _erf(x):
    # Abramowitz & Stegun 7.1.26 rational approximation (|err| < 1.5e-7) of the
    # exact erf used by torch's default F.gelu, using only exp / mul / add.
    p = 0.3275911
    a1, a2, a3, a4, a5 = (0.254829592, -0.284496736, 1.421413741,
                          -1.453152027, 1.061405429)
    s = jnp.where(x >= 0.0, 1.0, -1.0)
    ax = jnp.abs(x)
    t = 1.0 / (1.0 + p * ax)
    poly = ((((a5 * t + a4) * t + a3) * t + a2) * t + a1) * t
    return s * (1.0 - poly * jnp.exp(-ax * ax))


def _gelu_exact(x):
    return 0.5 * x * (1.0 + _erf(x * (1.0 / math.sqrt(2.0))))


# ---------------------------------------------------------------------------
# Kernel: one grid step == one graph.
#   x_ref    : (N, D_IN)     f32  node features (nodes on sublanes)
#   meta_ref : (M_ROWS, 4)   i32  cols [src, tgt, edge_type, node_type]
#                                 (edge rows padded with -1 are inert;
#                                  node_type lives in rows [0, N))
#   w_ref    : (D_IN, 4*T)   f32  fused K|Q|V|M weights, column 4*t + j
#   p_ref    : (8, 8)        f32  packed small params:
#                                 row 0            -> fused biases (4*T,)
#                                 rows 1..R        -> [rel_att, rel_msg, rel_pri]
#                                 rows 1+R..1+R+T-1-> [a_w, a_b, skip]
#   score_ref: (N, LANES)    f32  tanh score broadcast across lanes
# ---------------------------------------------------------------------------
def hgt_score_kernel(x_ref, meta_ref, w_ref, p_ref, score_ref):
    f32 = jnp.float32
    n, _ = x_ref.shape
    m_rows = meta_ref.shape[0]

    x    = x_ref[...]
    meta = meta_ref[...]
    w_in = w_ref[...]
    p    = p_ref[...]

    b_in    = p[0:1, 0:N_GROUPS * T]        # (1, 4*T)
    rel_tab = p[1:1 + R, 0:3]               # (R, 3): att, msg, pri
    typ_tab = p[1 + R:1 + R + T, 0:3]       # (T, 3): a_w, a_b, skip

    src_id = meta[:, 0:1]                   # (E, 1) i32 (-1 on padded rows)
    tgt_id = meta[:, 1:2]
    et_id  = meta[:, 2:3]
    nt_id  = meta[0:n, 3:4]                 # (N, 1) i32

    # One-hots built in-kernel from the packed int slab (saves 3 f32 DMAs;
    # -1 padding never matches the iota so padded edges are inert).
    node_iota = lax.broadcasted_iota(jnp.int32, (m_rows, n), 1)
    src_oh = (src_id == node_iota).astype(f32)                                 # (E, N)
    tgt_oh = (tgt_id == node_iota).astype(f32)                                 # (E, N)
    rel_oh = (et_id == lax.broadcasted_iota(jnp.int32, (m_rows, R), 1)).astype(f32)
    nt_oh  = (nt_id == lax.broadcasted_iota(jnp.int32, (n, T), 1)).astype(f32)  # (N, T)

    # ---- fused typed linears: one 4*T-lane MXU matmul, then one-hot select --
    y = jnp.dot(x, w_in, preferred_element_type=f32) + b_in        # (N, 4*T)
    sel = nt_oh[:, 0:1] * y[:, 0:N_GROUPS]
    for t in range(1, T):                                          # static, tiny
        sel = sel + nt_oh[:, t:t + 1] * y[:, N_GROUPS * t:N_GROUPS * (t + 1)]
    # sel columns: 0=K, 1=Q, 2=V, 3=Mapping (all (N, 1) since D_OUT == 1)
    mp = sel[:, 3:4]

    # ---- fused edge gathers (wide-lane one-hot matmuls) ---------------------
    src_g = jnp.dot(src_oh, sel, preferred_element_type=f32)       # (E, 4)
    tgt_g = jnp.dot(tgt_oh, sel, preferred_element_type=f32)       # (E, 4)
    k_j, v_j = src_g[:, 0:1], src_g[:, 2:3]
    q_i = tgt_g[:, 1:2]

    rel_p = jnp.dot(rel_oh, rel_tab, preferred_element_type=f32)   # (E, 3)
    r_att, r_msg, r_pri = rel_p[:, 0:1], rel_p[:, 1:2], rel_p[:, 2:3]

    # n_heads=1, d_k=1 => the per-head d_k x d_k bmm degenerates to scalars.
    logits = q_i * (k_j * r_att) * r_pri * (1.0 / SQRT_DK)         # (E, 1)
    msg = v_j * r_msg                                              # (E, 1)

    # ---- segment softmax over edges grouped by target node ------------------
    NEG = f32(-1e30)
    masked = jnp.where(tgt_oh > 0.0, logits, NEG)                  # (E, N)
    node_max = jnp.max(masked, axis=0)[:, None]                    # (N, 1)
    edge_max = jnp.dot(tgt_oh, node_max, preferred_element_type=f32)
    ex = jnp.exp(logits - edge_max)                                # (E, 1)

    def seg_sum(vals):   # scatter-add over target nodes: (E, k) -> (N, k)
        return lax.dot_general(tgt_oh, vals,
                               dimension_numbers=(((0,), (0,)), ((), ())),
                               preferred_element_type=f32)

    denom = seg_sum(ex)                                            # (N, 1)
    numer = seg_sum(ex * msg)                                      # (N, 1)
    # aggr = sum_e softmax_e * msg_e  ==  numer / denom  (0 for isolated nodes)
    aggr = numer / jnp.where(denom > 0.0, denom, 1.0)

    # ---- update: trans*alpha + mapping(x)*(1-alpha) (in_sag=True, dropout=id)
    node_p = jnp.dot(nt_oh, typ_tab, preferred_element_type=f32)   # (N, 3)
    h = _gelu_exact(aggr)
    trans = h * node_p[:, 0:1] + node_p[:, 1:2]                    # a_linears[type]
    alpha = jax.nn.sigmoid(node_p[:, 2:3])
    res = trans * alpha + mp * (1.0 - alpha)

    # SAG pooling score (min_score is None -> tanh); broadcast across 128 lanes
    # so the writeback is an unmasked full-lane store (lane-dense output).
    score = jnp.tanh(res)                                          # (N, 1)
    score_ref[...] = jnp.broadcast_to(score, (n, score_ref.shape[1]))


def hgt_scores(x, meta, w_in, p_small):
    """Batched HGT scoring: one pallas_call, grid over graphs."""
    b, n, d_in = x.shape
    m_rows, mcols = meta.shape[1], meta.shape[2]
    out = pl.pallas_call(
        hgt_score_kernel,
        grid=(b,),
        in_specs=[
            pl.BlockSpec((pl.Squeezed(), n, d_in), lambda g: (g, 0, 0)),
            pl.BlockSpec((pl.Squeezed(), m_rows, mcols), lambda g: (g, 0, 0)),
            # parameters: constant block index -> stay resident in VMEM
            pl.BlockSpec(w_in.shape, lambda g: (0, 0)),
            pl.BlockSpec(p_small.shape, lambda g: (0, 0)),
        ],
        out_specs=pl.BlockSpec((pl.Squeezed(), n, LANES), lambda g: (g, 0, 0)),
        out_shape=jax.ShapeDtypeStruct((b, n, LANES), jnp.float32),
        compiler_params=pltpu.CompilerParams(
            dimension_semantics=("parallel",)),   # shards graphs on v7x's 2 TCs
    )(x, meta, w_in, p_small)
    return out[:, :, 0]                           # (B, N) tanh scores


# ---------------------------------------------------------------------------
# Full MySAGPooling forward: scoring kernel + device-side topk / filter_adj.
# Inputs use the standard padded per-graph layout (the per-graph `batch`
# vector of the flat PyG representation is implicit).
# ---------------------------------------------------------------------------
@jax.jit
def my_sag_pooling(x, edge_index, node_type, edge_type, w_in, p_small):
    """x:(B,N,D_IN) f32; edge_index:(B,2,E) i32 (graph-local ids);
    node_type:(B,N) i32; edge_type:(B,E) i32.
    Returns (x_out, edge_index_out, node_type_out, edge_type_out, batch_out,
    edge_mask); edge slots dropped by filter_adj are marked -1 / mask=False."""
    b, n, _ = x.shape
    e = edge_index.shape[2]
    k = int(math.ceil(RATIO * n))             # topk(score, ratio, batch)

    m_rows = max(e, n)
    meta = jnp.full((b, m_rows, 4), -1, jnp.int32)   # -1 padding is inert
    meta = meta.at[:, :e, 0].set(edge_index[:, 0, :])
    meta = meta.at[:, :e, 1].set(edge_index[:, 1, :])
    meta = meta.at[:, :e, 2].set(edge_type)
    meta = meta.at[:, :n, 3].set(node_type)

    score = hgt_scores(x, meta, w_in, p_small)       # (B, N)

    # Per-graph top ceil(ratio*n) nodes, descending score.
    # NOTE: tie ordering may differ from torch.topk when scores tie exactly.
    top_s, perm = lax.top_k(score, k)                # (B, K), (B, K)
    x_out = jnp.take_along_axis(x, perm[:, :, None], axis=1) * top_s[:, :, None]
    node_type_out = jnp.take_along_axis(node_type, perm, axis=1)
    batch_out = jnp.broadcast_to(jnp.arange(b, dtype=jnp.int32)[:, None], (b, k))

    # filter_adj: keep edges with both endpoints selected, relabel to [0, K).
    relabel = jnp.full((b, n), -1, jnp.int32)
    relabel = relabel.at[jnp.arange(b)[:, None], perm].set(
        jnp.broadcast_to(jnp.arange(k, dtype=jnp.int32)[None, :], (b, k)))
    row = jnp.take_along_axis(relabel, edge_index[:, 0, :], axis=1)
    col = jnp.take_along_axis(relabel, edge_index[:, 1, :], axis=1)
    edge_mask = (row >= 0) & (col >= 0)
    edge_index_out = jnp.stack([jnp.where(edge_mask, row, -1),
                                jnp.where(edge_mask, col, -1)], axis=1)
    edge_type_out = jnp.where(edge_mask, edge_type, -1)
    # TODO(synk): compacting surviving edges to a ragged edge list has a
    # data-dependent shape; callers needing PyG's exact layout can compact
    # (edge_index_out, edge_type_out) with edge_mask on host.
    return x_out, edge_index_out, node_type_out, edge_type_out, batch_out, edge_mask


# ---------------------------------------------------------------------------
# Parameter init (matches the torch module's reset_parameters) and packing.
# ---------------------------------------------------------------------------
def init_params(key):
    ks = jax.random.split(key, 12)

    def lin(ka, kb, fan_in, fan_out):
        bound = 1.0 / math.sqrt(fan_in)   # nn.Linear-style uniform init
        w = jax.random.uniform(ka, (T, fan_in, fan_out), jnp.float32, -bound, bound)
        b = jax.random.uniform(kb, (T, fan_out), jnp.float32, -bound, bound)
        return w, b

    wk, bk = lin(ks[0], ks[1], D_IN, D_OUT)
    wq, bq = lin(ks[2], ks[3], D_IN, D_OUT)
    wv, bv = lin(ks[4], ks[5], D_IN, D_OUT)
    wm, bm = lin(ks[6], ks[7], D_IN, D_OUT)
    wa, ba = lin(ks[8], ks[9], D_OUT, D_OUT)
    g = math.sqrt(6.0 / (DK + DK))        # glorot for (R, H, DK, DK)
    rel_att = jax.random.uniform(ks[10], (R, H * DK * DK), jnp.float32, -g, g)
    rel_msg = jax.random.uniform(ks[11], (R, H * DK * DK), jnp.float32, -g, g)
    rel_pri = jnp.ones((R, H), jnp.float32)   # ones_ init
    skip    = jnp.ones((T, 1), jnp.float32)   # ones_ init
    return dict(wk=wk, bk=bk, wq=wq, bq=bq, wv=wv, bv=bv, wa=wa, ba=ba,
                wm=wm, bm=bm, rel_att=rel_att, rel_msg=rel_msg,
                rel_pri=rel_pri, skip=skip)


def pack_params(params):
    """Fuse weights / pack the tiny params into two kernel inputs."""
    w_cols, b_vals = [], []
    for t in range(T):
        for wname, bname in (("wk", "bk"), ("wq", "bq"), ("wv", "bv"), ("wm", "bm")):
            w_cols.append(params[wname][t, :, 0])   # (D_IN,)
            b_vals.append(params[bname][t, 0])
    w_in = jnp.stack(w_cols, axis=1).astype(jnp.float32)          # (D_IN, 4*T)

    p = jnp.zeros((8, 8), jnp.float32)
    p = p.at[0, 0:N_GROUPS * T].set(jnp.stack(b_vals))            # fused biases
    rel_tab = jnp.stack([params["rel_att"][:, 0], params["rel_msg"][:, 0],
                         params["rel_pri"][:, 0]], axis=1)        # (R, 3)
    p = p.at[1:1 + R, 0:3].set(rel_tab)
    typ_tab = jnp.stack([params["wa"][:, 0, 0], params["ba"][:, 0],
                         params["skip"][:, 0]], axis=1)           # (T, 3)
    p = p.at[1 + R:1 + R + T, 0:3].set(typ_tab)
    return w_in, p


if __name__ == "__main__":
    key = jax.random.PRNGKey(0)
    k_x, k_nt, k_src, k_dst, k_et, k_p = jax.random.split(key, 6)
    x = jax.random.normal(k_x, (B, N, D_IN), jnp.float32)
    node_type = jax.random.randint(k_nt, (B, N), 0, T)
    edge_index = jnp.stack([jax.random.randint(k_src, (B, E), 0, N),
                            jax.random.randint(k_dst, (B, E), 0, N)], axis=1)
    edge_type = jax.random.randint(k_et, (B, E), 0, R)
    params = init_params(k_p)
    w_in, p_small = pack_params(params)

    outs = my_sag_pooling(x, edge_index, node_type, edge_type, w_in, p_small)
    jax.block_until_ready(outs)
    print("KERNEL_OK")
</pallas_src>

<mosaic_0001>
module attributes {stable_mosaic.version = 11 : i64} {
  func.func @hgt_score_kernel(%arg0: i32, %arg1: memref<1x16x32xf32, #tpu.memory_space<vmem>>, %arg2: memref<1x48x4xi32, #tpu.memory_space<vmem>>, %arg3: memref<32x8xf32, #tpu.memory_space<vmem>>, %arg4: memref<8x8xf32, #tpu.memory_space<vmem>>, %arg5: memref<1x16x128xf32, #tpu.memory_space<vmem>>) attributes {dimension_semantics = [#tpu.dimension_semantics<parallel>], iteration_bounds = array<i64: 2>, scalar_prefetch = 0 : i64, scratch_operands = 0 : i64, tpu.core_type = #tpu.core_type<tc>, window_params = [{transform_indices = @transform_0, window_bounds = array<i64: 1, 16, 32>}, {transform_indices = @transform_1, window_bounds = array<i64: 1, 48, 4>}, {pipeline_mode = #tpu.pipeline_mode<synchronous>, transform_indices = @transform_2, window_bounds = array<i64: 32, 8>}, {pipeline_mode = #tpu.pipeline_mode<synchronous>, transform_indices = @transform_3, window_bounds = array<i64: 8, 8>}, {transform_indices = @transform_4, window_bounds = array<i64: 1, 16, 128>}]} {
    %c0 = arith.constant 0 : index
    %c0_0 = arith.constant 0 : index
    %c0_1 = arith.constant 0 : index
    %0 = vector.load %arg1[%c0, %c0_0, %c0_1] : memref<1x16x32xf32, #tpu.memory_space<vmem>>, vector<1x16x32xf32>
    %1 = vector.shape_cast %0 : vector<1x16x32xf32> to vector<16x32xf32>
    %c0_2 = arith.constant 0 : index
    %c0_3 = arith.constant 0 : index
    %c0_4 = arith.constant 0 : index
    %2 = vector.load %arg2[%c0_2, %c0_3, %c0_4] : memref<1x48x4xi32, #tpu.memory_space<vmem>>, vector<1x48x4xi32>
    %3 = vector.shape_cast %2 : vector<1x48x4xi32> to vector<48x4xi32>
    %c0_5 = arith.constant 0 : index
    %c0_6 = arith.constant 0 : index
    %4 = vector.load %arg3[%c0_5, %c0_6] : memref<32x8xf32, #tpu.memory_space<vmem>>, vector<32x8xf32>
    %c0_7 = arith.constant 0 : index
    %c0_8 = arith.constant 0 : index
    %5 = vector.load %arg4[%c0_7, %c0_8] : memref<8x8xf32, #tpu.memory_space<vmem>>, vector<8x8xf32>
    %6 = vector.extract_strided_slice %5 {offsets = [0, 0], sizes = [1, 8], strides = [1, 1]} : vector<8x8xf32> to vector<1x8xf32>
    %7 = vector.extract_strided_slice %5 {offsets = [1, 0], sizes = [2, 3], strides = [1, 1]} : vector<8x8xf32> to vector<2x3xf32>
    %8 = vector.extract_strided_slice %5 {offsets = [3, 0], sizes = [2, 3], strides = [1, 1]} : vector<8x8xf32> to vector<2x3xf32>
    %9 = vector.extract_strided_slice %3 {offsets = [0, 0], sizes = [48, 1], strides = [1, 1]} : vector<48x4xi32> to vector<48x1xi32>
    %10 = vector.extract_strided_slice %3 {offsets = [0, 1], sizes = [48, 1], strides = [1, 1]} : vector<48x4xi32> to vector<48x1xi32>
    %11 = vector.extract_strided_slice %3 {offsets = [0, 2], sizes = [48, 1], strides = [1, 1]} : vector<48x4xi32> to vector<48x1xi32>
    %12 = vector.extract_strided_slice %3 {offsets = [0, 3], sizes = [16, 1], strides = [1, 1]} : vector<48x4xi32> to vector<16x1xi32>
    %13 = tpu.iota {dimensions = array<i32: 1>} : vector<48x16xi32>
    %14 = vector.broadcast %9 : vector<48x1xi32> to vector<48x16xi32>
    %15 = arith.cmpi eq, %14, %13 : vector<48x16xi32>
    %16 = arith.extui %15 : vector<48x16xi1> to vector<48x16xi32>
    %17 = arith.sitofp %16 : vector<48x16xi32> to vector<48x16xf32>
    %18 = vector.broadcast %10 : vector<48x1xi32> to vector<48x16xi32>
    %19 = arith.cmpi eq, %18, %13 : vector<48x16xi32>
    %20 = arith.extui %19 : vector<48x16xi1> to vector<48x16xi32>
    %21 = arith.sitofp %20 : vector<48x16xi32> to vector<48x16xf32>
    %22 = tpu.iota {dimensions = array<i32: 1>} : vector<48x2xi32>
    %23 = vector.broadcast %11 : vector<48x1xi32> to vector<48x2xi32>
    %24 = arith.cmpi eq, %23, %22 : vector<48x2xi32>
    %25 = arith.extui %24 : vector<48x2xi1> to vector<48x2xi32>
    %26 = arith.sitofp %25 : vector<48x2xi32> to vector<48x2xf32>
    %27 = tpu.iota {dimensions = array<i32: 1>} : vector<16x2xi32>
    %28 = vector.broadcast %12 : vector<16x1xi32> to vector<16x2xi32>
    %29 = arith.cmpi eq, %28, %27 : vector<16x2xi32>
    %30 = arith.extui %29 : vector<16x2xi1> to vector<16x2xi32>
    %31 = arith.sitofp %30 : vector<16x2xi32> to vector<16x2xf32>
    %cst = arith.constant dense<0.000000e+00> : vector<16x8xf32>
    %32 = tpu.matmul %1, %4, %cst {dimension_numbers = #tpu.dot_dimension_numbers<[1], [0], [0], [1], [0, 0, 1, 1], [], []>} : vector<16x32xf32>, vector<32x8xf32>, vector<16x8xf32> -> vector<16x8xf32>
    %33 = vector.broadcast %6 : vector<1x8xf32> to vector<16x8xf32>
    %34 = arith.addf %32, %33 : vector<16x8xf32>
    %35 = vector.extract_strided_slice %31 {offsets = [0, 0], sizes = [16, 1], strides = [1, 1]} : vector<16x2xf32> to vector<16x1xf32>
    %36 = vector.extract_strided_slice %34 {offsets = [0, 0], sizes = [16, 4], strides = [1, 1]} : vector<16x8xf32> to vector<16x4xf32>
    %37 = vector.broadcast %35 : vector<16x1xf32> to vector<16x4xf32>
    %38 = arith.mulf %37, %36 : vector<16x4xf32>
    %39 = vector.extract_strided_slice %31 {offsets = [0, 1], sizes = [16, 1], strides = [1, 1]} : vector<16x2xf32> to vector<16x1xf32>
    %40 = vector.extract_strided_slice %34 {offsets = [0, 4], sizes = [16, 4], strides = [1, 1]} : vector<16x8xf32> to vector<16x4xf32>
    %41 = vector.broadcast %39 : vector<16x1xf32> to vector<16x4xf32>
    %42 = arith.mulf %41, %40 : vector<16x4xf32>
    %43 = arith.addf %38, %42 : vector<16x4xf32>
    %44 = vector.extract_strided_slice %43 {offsets = [0, 3], sizes = [16, 1], strides = [1, 1]} : vector<16x4xf32> to vector<16x1xf32>
    %cst_9 = arith.constant dense<0.000000e+00> : vector<48x4xf32>
    %45 = tpu.matmul %17, %43, %cst_9 {dimension_numbers = #tpu.dot_dimension_numbers<[1], [0], [0], [1], [0, 0, 1, 1], [], []>} : vector<48x16xf32>, vector<16x4xf32>, vector<48x4xf32> -> vector<48x4xf32>
    %cst_10 = arith.constant dense<0.000000e+00> : vector<48x4xf32>
    %46 = tpu.matmul %21, %43, %cst_10 {dimension_numbers = #tpu.dot_dimension_numbers<[1], [0], [0], [1], [0, 0, 1, 1], [], []>} : vector<48x16xf32>, vector<16x4xf32>, vector<48x4xf32> -> vector<48x4xf32>
    %47 = vector.extract_strided_slice %45 {offsets = [0, 0], sizes = [48, 1], strides = [1, 1]} : vector<48x4xf32> to vector<48x1xf32>
    %48 = vector.extract_strided_slice %45 {offsets = [0, 2], sizes = [48, 1], strides = [1, 1]} : vector<48x4xf32> to vector<48x1xf32>
    %49 = vector.extract_strided_slice %46 {offsets = [0, 1], sizes = [48, 1], strides = [1, 1]} : vector<48x4xf32> to vector<48x1xf32>
    %cst_11 = arith.constant dense<0.000000e+00> : vector<48x3xf32>
    %50 = tpu.matmul %26, %7, %cst_11 {dimension_numbers = #tpu.dot_dimension_numbers<[1], [0], [0], [1], [0, 0, 1, 1], [], []>} : vector<48x2xf32>, vector<2x3xf32>, vector<48x3xf32> -> vector<48x3xf32>
    %51 = vector.extract_strided_slice %50 {offsets = [0, 0], sizes = [48, 1], strides = [1, 1]} : vector<48x3xf32> to vector<48x1xf32>
    %52 = vector.extract_strided_slice %50 {offsets = [0, 1], sizes = [48, 1], strides = [1, 1]} : vector<48x3xf32> to vector<48x1xf32>
    %53 = vector.extract_strided_slice %50 {offsets = [0, 2], sizes = [48, 1], strides = [1, 1]} : vector<48x3xf32> to vector<48x1xf32>
    %54 = arith.mulf %47, %51 : vector<48x1xf32>
    %55 = arith.mulf %49, %54 : vector<48x1xf32>
    %56 = arith.mulf %55, %53 : vector<48x1xf32>
    %cst_12 = arith.constant 1.000000e+00 : f32
    %57 = vector.broadcast %cst_12 : f32 to vector<48x1xf32>
    %58 = arith.mulf %56, %57 : vector<48x1xf32>
    %59 = arith.mulf %48, %52 : vector<48x1xf32>
    %cst_13 = arith.constant 0.000000e+00 : f32
    %60 = vector.broadcast %cst_13 : f32 to vector<48x16xf32>
    %61 = arith.cmpf ogt, %21, %60 : vector<48x16xf32>
    %cst_14 = arith.constant -1.000000e+30 : f32
    %62 = vector.shape_cast %58 : vector<48x1xf32> to vector<48x1xf32>
    %63 = vector.broadcast %62 : vector<48x1xf32> to vector<48x16xf32>
    %64 = vector.broadcast %cst_14 : f32 to vector<48x16xf32>
    %65 = arith.select %61, %63, %64 : vector<48x16xi1>, vector<48x16xf32>
    %cst_15 = arith.constant dense<0xFF800000> : vector<16xf32>
    %66 = vector.multi_reduction <maximumf>, %65, %cst_15 [0] : vector<48x16xf32> to vector<16xf32>
    %67 = vector.shape_cast %66 : vector<16xf32> to vector<16x1xf32>
    %cst_16 = arith.constant dense<0.000000e+00> : vector<48x1xf32>
    %68 = tpu.matmul %21, %67, %cst_16 {dimension_numbers = #tpu.dot_dimension_numbers<[1], [0], [0], [1], [0, 0, 1, 1], [], []>} : vector<48x16xf32>, vector<16x1xf32>, vector<48x1xf32> -> vector<48x1xf32>
    %69 = arith.subf %58, %68 : vector<48x1xf32>
    %70 = math.exp %69 : vector<48x1xf32>
    %cst_17 = arith.constant dense<0.000000e+00> : vector<16x1xf32>
    %71 = tpu.matmul %21, %70, %cst_17 {dimension_numbers = #tpu.dot_dimension_numbers<[0], [0], [1], [1], [0, 1, 1, 1], [], []>} : vector<48x16xf32>, vector<48x1xf32>, vector<16x1xf32> -> vector<16x1xf32>
    %72 = arith.mulf %70, %59 : vector<48x1xf32>
    %cst_18 = arith.constant dense<0.000000e+00> : vector<16x1xf32>
    %73 = tpu.matmul %21, %72, %cst_18 {dimension_numbers = #tpu.dot_dimension_numbers<[0], [0], [1], [1], [0, 1, 1, 1], [], []>} : vector<48x16xf32>, vector<48x1xf32>, vector<16x1xf32> -> vector<16x1xf32>
    %cst_19 = arith.constant 0.000000e+00 : f32
    %74 = vector.broadcast %cst_19 : f32 to vector<16x1xf32>
    %75 = arith.cmpf ogt, %71, %74 : vector<16x1xf32>
    %cst_20 = arith.constant 1.000000e+00 : f32
    %76 = vector.broadcast %cst_20 : f32 to vector<16x1xf32>
    %77 = arith.select %75, %71, %76 : vector<16x1xi1>, vector<16x1xf32>
    %78 = arith.divf %73, %77 : vector<16x1xf32>
    %cst_21 = arith.constant dense<0.000000e+00> : vector<16x3xf32>
    %79 = tpu.matmul %31, %8, %cst_21 {dimension_numbers = #tpu.dot_dimension_numbers<[1], [0], [0], [1], [0, 0, 1, 1], [], []>} : vector<16x2xf32>, vector<2x3xf32>, vector<16x3xf32> -> vector<16x3xf32>
    %cst_22 = arith.constant 5.000000e-01 : f32
    %80 = vector.broadcast %cst_22 : f32 to vector<16x1xf32>
    %81 = arith.mulf %80, %78 : vector<16x1xf32>
    %cst_23 = arith.constant 0.707106769 : f32
    %82 = vector.broadcast %cst_23 : f32 to vector<16x1xf32>
    %83 = arith.mulf %78, %82 : vector<16x1xf32>
    %cst_24 = arith.constant 0.000000e+00 : f32
    %84 = vector.broadcast %cst_24 : f32 to vector<16x1xf32>
    %85 = arith.cmpf oge, %83, %84 : vector<16x1xf32>
    %cst_25 = arith.constant 1.000000e+00 : f32
    %cst_26 = arith.constant -1.000000e+00 : f32
    %86 = vector.broadcast %cst_25 : f32 to vector<16x1xf32>
    %87 = vector.broadcast %cst_26 : f32 to vector<16x1xf32>
    %88 = arith.select %85, %86, %87 : vector<16x1xi1>, vector<16x1xf32>
    %89 = math.absf %83 : vector<16x1xf32>
    %cst_27 = arith.constant 0.327591091 : f32
    %90 = vector.broadcast %cst_27 : f32 to vector<16x1xf32>
    %91 = arith.mulf %90, %89 : vector<16x1xf32>
    %cst_28 = arith.constant 1.000000e+00 : f32
    %92 = vector.broadcast %cst_28 : f32 to vector<16x1xf32>
    %93 = arith.addf %92, %91 : vector<16x1xf32>
    %cst_29 = arith.constant 1.000000e+00 : f32
    %94 = vector.broadcast %cst_29 : f32 to vector<16x1xf32>
    %95 = arith.divf %94, %93 : vector<16x1xf32>
    %cst_30 = arith.constant 1.06140542 : f32
    %96 = vector.broadcast %cst_30 : f32 to vector<16x1xf32>
    %97 = arith.mulf %96, %95 : vector<16x1xf32>
    %cst_31 = arith.constant -1.45315206 : f32
    %98 = vector.broadcast %cst_31 : f32 to vector<16x1xf32>
    %99 = arith.addf %97, %98 : vector<16x1xf32>
    %100 = arith.mulf %99, %95 : vector<16x1xf32>
    %cst_32 = arith.constant 1.42141378 : f32
    %101 = vector.broadcast %cst_32 : f32 to vector<16x1xf32>
    %102 = arith.addf %100, %101 : vector<16x1xf32>
    %103 = arith.mulf %102, %95 : vector<16x1xf32>
    %cst_33 = arith.constant -0.284496725 : f32
    %104 = vector.broadcast %cst_33 : f32 to vector<16x1xf32>
    %105 = arith.addf %103, %104 : vector<16x1xf32>
    %106 = arith.mulf %105, %95 : vector<16x1xf32>
    %cst_34 = arith.constant 0.254829586 : f32
    %107 = vector.broadcast %cst_34 : f32 to vector<16x1xf32>
    %108 = arith.addf %106, %107 : vector<16x1xf32>
    %109 = arith.mulf %108, %95 : vector<16x1xf32>
    %cst_35 = arith.constant 0.000000e+00 : f32
    %110 = vector.broadcast %cst_35 : f32 to vector<16x1xf32>
    %111 = arith.subf %110, %89 : vector<16x1xf32>
    %112 = arith.mulf %111, %89 : vector<16x1xf32>
    %113 = math.exp %112 : vector<16x1xf32>
    %114 = arith.mulf %109, %113 : vector<16x1xf32>
    %cst_36 = arith.constant 1.000000e+00 : f32
    %115 = vector.broadcast %cst_36 : f32 to vector<16x1xf32>
    %116 = arith.subf %115, %114 : vector<16x1xf32>
    %117 = arith.mulf %88, %116 : vector<16x1xf32>
    %cst_37 = arith.constant 1.000000e+00 : f32
    %118 = vector.broadcast %cst_37 : f32 to vector<16x1xf32>
    %119 = arith.addf %118, %117 : vector<16x1xf32>
    %120 = arith.mulf %81, %119 : vector<16x1xf32>
    %121 = vector.extract_strided_slice %79 {offsets = [0, 0], sizes = [16, 1], strides = [1, 1]} : vector<16x3xf32> to vector<16x1xf32>
    %122 = arith.mulf %120, %121 : vector<16x1xf32>
    %123 = vector.extract_strided_slice %79 {offsets = [0, 1], sizes = [16, 1], strides = [1, 1]} : vector<16x3xf32> to vector<16x1xf32>
    %124 = arith.addf %122, %123 : vector<16x1xf32>
    %125 = vector.extract_strided_slice %79 {offsets = [0, 2], sizes = [16, 1], strides = [1, 1]} : vector<16x3xf32> to vector<16x1xf32>
    %126 = arith.negf %125 : vector<16x1xf32>
    %127 = math.exp %126 : vector<16x1xf32>
    %cst_38 = arith.constant 1.000000e+00 : f32
    %128 = vector.broadcast %cst_38 : f32 to vector<16x1xf32>
    %129 = arith.addf %128, %127 : vector<16x1xf32>
    %130 = arith.divf %128, %129 : vector<16x1xf32>
    %131 = arith.mulf %124, %130 : vector<16x1xf32>
    %cst_39 = arith.constant 1.000000e+00 : f32
    %132 = vector.broadcast %cst_39 : f32 to vector<16x1xf32>
    %133 = arith.subf %132, %130 : vector<16x1xf32>
    %134 = arith.mulf %44, %133 : vector<16x1xf32>
    %135 = arith.addf %131, %134 : vector<16x1xf32>
    %136 = math.tanh %135 : vector<16x1xf32>
    %137 = vector.shape_cast %136 : vector<16x1xf32> to vector<16x1xf32>
    %138 = vector.broadcast %137 : vector<16x1xf32> to vector<16x128xf32>
    %c0_40 = arith.constant 0 : index
    %c0_41 = arith.constant 0 : index
    %c0_42 = arith.constant 0 : index
    %139 = vector.load %arg5[%c0_40, %c0_41, %c0_42] : memref<1x16x128xf32, #tpu.memory_space<vmem>>, vector<1x16x128xf32>
    %140 = vector.shape_cast %139 : vector<1x16x128xf32> to vector<16x128xf32>
    %141 = vector.shape_cast %138 : vector<16x128xf32> to vector<1x16x128xf32>
    tpu.vector_store %arg5[%c0_40, %c0_41, %c0_42], %141 {strides = array<i32>} : memref<1x16x128xf32, #tpu.memory_space<vmem>>, vector<1x16x128xf32>,
    return
  }
  func.func @transform_0(%arg0: i32) -> (i32, i32, i32) {
    %c0_i32 = arith.constant 0 : i32
    %c0_i32_0 = arith.constant 0 : i32
    %c0_i32_1 = arith.constant 0 : i32
    return %arg0, %c0_i32, %c0_i32_0 : i32, i32, i32
  }
  func.func @transform_1(%arg0: i32) -> (i32, i32, i32) {
    %c0_i32 = arith.constant 0 : i32
    %c0_i32_0 = arith.constant 0 : i32
    %c0_i32_1 = arith.constant 0 : i32
    return %arg0, %c0_i32, %c0_i32_0 : i32, i32, i32
  }
  func.func @transform_2(%arg0: i32) -> (i32, i32) {
    %c0_i32 = arith.constant 0 : i32
    %c0_i32_0 = arith.constant 0 : i32
    %c0_i32_1 = arith.constant 0 : i32
    return %c0_i32, %c0_i32_0 : i32, i32
  }
  func.func @transform_3(%arg0: i32) -> (i32, i32) {
    %c0_i32 = arith.constant 0 : i32
    %c0_i32_0 = arith.constant 0 : i32
    %c0_i32_1 = arith.constant 0 : i32
    return %c0_i32, %c0_i32_0 : i32, i32
  }
  func.func @transform_4(%arg0: i32) -> (i32, i32, i32) {
    %c0_i32 = arith.constant 0 : i32
    %c0_i32_0 = arith.constant 0 : i32
    %c0_i32_1 = arith.constant 0 : i32
    return %arg0, %c0_i32, %c0_i32_0 : i32, i32, i32
  }
}

</mosaic_0001>

<llo_original>
// kernel: my_sag_pooling.1
$region0: #{my_sag_pooling.1}
  #allocation0 [shape = 'u32[]', space=smem, size = 0x4, offset = 0x4, fixed_abs, tag = 'smem constant byte address 0x4 - core index']
  #allocation1 [shape = 'u32[72,128]{1,0:T(1,128)}', space=vmem, size = 0x9000, scoped, tag = 'internal scratch']
  %s0 = inlined_call_operand.vmem [shape: f32[2,16,32], index: 0, kind: input, shape index: {}]
  %s1 = inlined_call_operand.vmem [shape: s32[2,48,4], index: 1, kind: input, shape index: {}]
  %s2 = inlined_call_operand.vmem [shape: f32[32,8], index: 2, kind: input, shape index: {}]
  %s3 = inlined_call_operand.vmem [shape: f32[8,8], index: 3, kind: input, shape index: {}]
  %s4 = inlined_call_operand.vmem [shape: f32[2,16,128], index: 4, kind: output, shape index: {}]
  %s5 = sld [smem:[#allocation0]]
  $region49: #{my_sag_pooling.1} parent=0
    _
  %s7 = ssub.s32 1, %s5
  %s8 = scalar_select 0, %s7, %s5
  loop: start=0, step=1, limit=4
  $region2: #{my_sag_pooling.1} parent=0 // loop_pre_header
    _
  $region3: #{my_sag_pooling.1} parent=0 // loop_header
    %s10 = sphi 0, %s14
    %p11 = scmp.ge.s32.totalorder %s10, 4
    %s20 = sphi 0, %s22
    %s23 = sphi 0, %s20
    %s24 = sphi 0, %s23
    %s40 = sphi 0, %s24
    %s46 = sphi 0, %s48
    %s49 = sphi 0, %s46
    %s50 = sphi 0, %s49
    %s66 = sphi 0, %s50
    %s70 = sphi 0, %s70
    %s72 = sphi 0, %s70
    %s73 = sphi 0, %s72
    %s87 = sphi 0, %s73
    %s91 = sphi 0, %s91
    %s93 = sphi 0, %s91
    %s94 = sphi 0, %s93
    %s108 = sphi 0, %s94
    %s114 = sphi 0, %s116
    %s117 = sphi 0, %s114
    %s118 = sphi 0, %s117
    %s134 = sphi 0, %s118
  $region4: #{my_sag_pooling.1} parent=0 // loop_header_branch
    %13 = sbr.rel (%p11) target = $region8
  $region5: #{my_sag_pooling.1} parent=0 // loop_body
    %s15 = ssub.s32 %s10, 1
    %s16 = ssub.s32 %s10, 2
    %s17 = sadd.s32 %s10, 1
    %s18 = ssub.s32 %s10, %s17
    %p19 = scmp.eq.s32.totalorder %s18, 0
    %s21 = sadd.s32 %s20, 1
    %s22 = scalar_select %p19, %s20, %s21
    %p25 = pneg %p19
    %p26 = scmp.eq.s32.totalorder %s10, 1
    %p27 = por %p25, %p26
    %p28 = scmp.ne.s32.totalorder %s20, %s23
    %p29 = scmp.eq.s32.totalorder %s10, 0
    %p30 = por %p28, %p29
    %p31 = scmp.ne.s32.totalorder %s20, %s23
    %p32 = scmp.eq.s32.totalorder %s15, 1
    %p33 = por %p31, %p32
    %p34 = scmp.ne.s32.totalorder %s23, %s24
    %p35 = scmp.eq.s32.totalorder %s15, 0
    %p36 = por %p34, %p35
    %p37 = scmp.ne.s32.totalorder %s23, %s24
    %p38 = scmp.eq.s32.totalorder %s16, 1
    %p39 = por %p37, %p38
    %p41 = scmp.ne.s32.totalorder %s24, %s40
    %p42 = scmp.eq.s32.totalorder %s16, 0
    %p43 = por %p41, %p42
    %s44 = ssub.s32 %s10, %s17
    %p45 = scmp.eq.s32.totalorder %s44, 0
    %s47 = sadd.s32 %s46, 1
    %s48 = scalar_select %p45, %s46, %s47
    %p51 = pneg %p45
    %p52 = scmp.eq.s32.totalorder %s10, 1
    %p53 = por %p51, %p52
    %p54 = scmp.ne.s32.totalorder %s46, %s49
    %p55 = scmp.eq.s32.totalorder %s10, 0
    %p56 = por %p54, %p55
    %p57 = scmp.ne.s32.totalorder %s46, %s49
    %p58 = scmp.eq.s32.totalorder %s15, 1
    %p59 = por %p57, %p58
    %p60 = scmp.ne.s32.totalorder %s49, %s50
    %p61 = scmp.eq.s32.totalorder %s15, 0
    %p62 = por %p60, %p61
    %p63 = scmp.ne.s32.totalorder %s49, %s50
    %p64 = scmp.eq.s32.totalorder %s16, 1
    %p65 = por %p63, %p64
    %p67 = scmp.ne.s32.totalorder %s50, %s66
    %p68 = scmp.eq.s32.totalorder %s16, 0
    %p69 = por %p67, %p68
    %s71 = sadd.s32 %s70, 1
    %p74 = scmp.eq.s32.totalorder %s10, 1
    %p75 = scmp.ne.s32.totalorder %s70, %s72
    %p76 = scmp.eq.s32.totalorder %s10, 0
    %p77 = por %p75, %p76
    %p78 = scmp.ne.s32.totalorder %s70, %s72
    %p79 = scmp.eq.s32.totalorder %s15, 1
    %p80 = por %p78, %p79
    %p81 = scmp.ne.s32.totalorder %s72, %s73
    %p82 = scmp.eq.s32.totalorder %s15, 0
    %p83 = por %p81, %p82
    %p84 = scmp.ne.s32.totalorder %s72, %s73
    %p85 = scmp.eq.s32.totalorder %s16, 1
    %p86 = por %p84, %p85
    %p88 = scmp.ne.s32.totalorder %s73, %s87
    %p89 = scmp.eq.s32.totalorder %s16, 0
    %p90 = por %p88, %p89
    %s92 = sadd.s32 %s91, 1
    %p95 = scmp.eq.s32.totalorder %s10, 1
    %p96 = scmp.ne.s32.totalorder %s91, %s93
    %p97 = scmp.eq.s32.totalorder %s10, 0
    %p98 = por %p96, %p97
    %p99 = scmp.ne.s32.totalorder %s91, %s93
    %p100 = scmp.eq.s32.totalorder %s15, 1
    %p101 = por %p99, %p100
    %p102 = scmp.ne.s32.totalorder %s93, %s94
    %p103 = scmp.eq.s32.totalorder %s15, 0
    %p104 = por %p102, %p103
    %p105 = scmp.ne.s32.totalorder %s93, %s94
    %p106 = scmp.eq.s32.totalorder %s16, 1
    %p107 = por %p105, %p106
    %p109 = scmp.ne.s32.totalorder %s94, %s108
    %p110 = scmp.eq.s32.totalorder %s16, 0
    %p111 = por %p109, %p110
    %s112 = ssub.s32 %s10, %s17
    %p113 = scmp.eq.s32.totalorder %s112, 0
    %s115 = sadd.s32 %s114, 1
    %s116 = scalar_select %p113, %s114, %s115
    %p119 = pneg %p113
    %p120 = scmp.eq.s32.totalorder %s10, 1
    %p121 = por %p119, %p120
    %p122 = scmp.ne.s32.totalorder %s114, %s117
    %p123 = scmp.eq.s32.totalorder %s10, 0
    %p124 = por %p122, %p123
    %p125 = scmp.ne.s32.totalorder %s114, %s117
    %p126 = scmp.eq.s32.totalorder %s15, 1
    %p127 = por %p125, %p126
    %p128 = scmp.ne.s32.totalorder %s117, %s118
    %p129 = scmp.eq.s32.totalorder %s15, 0
    %p130 = por %p128, %p129
    %p131 = scmp.ne.s32.totalorder %s117, %s118
    %p132 = scmp.eq.s32.totalorder %s16, 1
    %p133 = por %p131, %p132
    %p135 = scmp.ne.s32.totalorder %s118, %s134
    %p136 = scmp.eq.s32.totalorder %s16, 0
    %p137 = por %p135, %p136
    %p138 = scmp.le.s32.totalorder 1, %s10
    %p139 = scmp.lt.s32.totalorder %s10, 3
    %p140 = pnand %p138, %p139
    %p141 = pneg %p140
    // Predicated region
    $region9: #{my_sag_pooling.1} parent=5 // pred_check
      _
    $region10: #{my_sag_pooling.1} parent=5 // pred_check_branch
      %143 = sbr.rel (%p140) target = $region12
    $region11: #{my_sag_pooling.1} parent=5 // pred_region
      %s144 = ssub.s32 %s10, 1
      // Predicated region
      $region13: #{my_sag_pooling.1} parent=11 // pred_check
        %p145 = pneg %p83
      $region14: #{my_sag_pooling.1} parent=11 // pred_check_branch
        %147 = sbr.rel (%p145) target = $region16
      $region15: #{my_sag_pooling.1} parent=11 // pred_region
        _
      $region16: #{my_sag_pooling.1} parent=11 // pred_fallthru
        _
      // Predicated region
      $region17: #{my_sag_pooling.1} parent=11 // pred_check
        %p148 = pneg %p104
      $region18: #{my_sag_pooling.1} parent=11 // pred_check_branch
        %150 = sbr.rel (%p148) target = $region20
      $region19: #{my_sag_pooling.1} parent=11 // pred_region
        _
      $region20: #{my_sag_pooling.1} parent=11 // pred_fallthru
        _
    $region12: #{my_sag_pooling.1} parent=5 // pred_fallthru
      _
    %p151 = scmp.lt.s32.totalorder %s10, 2
    // Predicated region
    $region21: #{my_sag_pooling.1} parent=5 // pred_check
      %p152 = pneg %p151
    $region22: #{my_sag_pooling.1} parent=5 // pred_check_branch
      %154 = sbr.rel (%p152) target = $region24
    $region23: #{my_sag_pooling.1} parent=5 // pred_region
      // Predicated region
      $region25: #{my_sag_pooling.1} parent=23 // pred_check
        %p155 = pneg %p30
      $region26: #{my_sag_pooling.1} parent=23 // pred_check_branch
        %157 = sbr.rel (%p155) target = $region28
      $region27: #{my_sag_pooling.1} parent=23 // pred_region
        %p158 = scmp.lt.s32.totalorder %s10, 1
        %s159 = scalar_select %p158, %s10, 1
        %s160 = smul.addr %s159, 2
        %s161 = smul.addr %s160, 8
        %s162 = scalar_lea.vmem %s0, %s161
      $region28: #{my_sag_pooling.1} parent=23 // pred_fallthru
        _
      // Predicated region
      $region29: #{my_sag_pooling.1} parent=23 // pred_check
        %p163 = pneg %p56
      $region30: #{my_sag_pooling.1} parent=23 // pred_check_branch
        %165 = sbr.rel (%p163) target = $region32
      $region31: #{my_sag_pooling.1} parent=23 // pred_region
        %p166 = scmp.lt.s32.totalorder %s10, 1
        %s167 = scalar_select %p166, %s10, 1
        %s168 = smul.addr %s167, 6
        %s169 = smul.addr %s168, 8
        %s170 = scalar_lea.vmem %s1, %s169
      $region32: #{my_sag_pooling.1} parent=23 // pred_fallthru
        _
    $region24: #{my_sag_pooling.1} parent=5 // pred_fallthru
      _
    %p171 = scmp.le.s32.totalorder 1, %s10
    %p172 = scmp.lt.s32.totalorder %s10, 3
    %p173 = pnand %p171, %p172
    %p174 = pneg %p173
    // Predicated region
    $region33: #{my_sag_pooling.1} parent=5 // pred_check
      _
    $region34: #{my_sag_pooling.1} parent=5 // pred_check_branch
      %176 = sbr.rel (%p173) target = $region36
    $region35: #{my_sag_pooling.1} parent=5 // pred_region
      %s177 = ssub.s32 %s10, 1
      %p178 = scmp.lt.s32.totalorder %s15, 1
      %s179 = scalar_select %p178, %s15, 1
      %s180 = smul.addr %s179, 2
      %s181 = smul.addr %s180, 8
      %s182 = scalar_lea.vmem %s0, %s181
      %p183 = pneg %p36
      %p184 = pneg %p33
      %p185 = scmp.lt.s32.totalorder %s15, 1
      %s186 = scalar_select %p185, %s15, 1
      %s187 = smul.addr %s186, 6
      %s188 = smul.addr %s187, 8
      %s189 = scalar_lea.vmem %s1, %s188
      %p190 = pneg %p62
      %p191 = pneg %p59
      %p192 = pneg %p83
      %p193 = pneg %p80
      %p194 = pneg %p104
      %p195 = pneg %p101
      %p196 = pneg %p130
      %p197 = pneg %p127
      %p198 = scmp.lt.s32.totalorder %s15, 1
      %s199 = scalar_select %p198, %s15, 1
      %s200 = smul.addr %s199, 2
      %s201 = smul.addr %s200, 8
      %s202 = scalar_lea.vmem %s4, %s201
      %p203 = scmp.lt.s32.totalorder %s15, 1
      %s204 = scalar_select %p203, %s15, 1
      %s205 = smul.addr %s204, 2
      %s206 = smul.addr %s205, 8
      %s207 = scalar_lea.vmem %s0, %s206
      %p208 = scmp.lt.s32.totalorder %s15, 1
      %s209 = scalar_select %p208, %s15, 1
      %s210 = smul.addr %s209, 6
      %s211 = smul.addr %s210, 8
      %s212 = scalar_lea.vmem %s1, %s211
      %p213 = scmp.lt.s32.totalorder %s15, 1
      %s214 = scalar_select %p213, %s15, 1
      %s215 = smul.addr %s214, 2
      %s216 = smul.addr %s215, 8
      %s217 = scalar_lea.vmem %s4, %s216
      %v218 = vld [vmem:[%s207] sm:$0xff]
      %v219 = vld [vmem:[%s207 + $0x8] sm:$0xff]
      %v220 = vld [vmem:[%s212] sm:$0xff]
      %v221 = vld [vmem:[%s212 + $0x8] sm:$0xff]
      %v222 = vld [vmem:[%s212 + $0x10] sm:$0xff]
      %v223 = vld [vmem:[%s212 + $0x18] sm:$0xff]
      %v224 = vld [vmem:[%s212 + $0x20] sm:$0xff]
      %v225 = vld [vmem:[%s212 + $0x28] sm:$0xff]
      %v226 = vld [vmem:[%s2] sm:$0xff]
      %v227 = vld [vmem:[%s2 + $0x8] sm:$0xff]
      %v228 = vld [vmem:[%s2 + $0x10] sm:$0xff]
      %v229 = vld [vmem:[%s2 + $0x18] sm:$0xff]
      %v230 = vld [vmem:[%s3] sm:$0xff]
      %v231 = vlaneseq
      %v232 = vand.u32 %v231, 127
      %233 = vset.pattern.permute.xlu0 0
      %234 = vperm.xlu0 %233, %v220
      %v235 = vpop.permute.xlu0 %234
      %236 = vset.pattern.permute.xlu0 0
      %237 = vperm.xlu0 %236, %v221
      %v238 = vpop.permute.xlu0 %237
      %239 = vset.pattern.permute.xlu0 0
      %240 = vperm.xlu0 %239, %v222
      %v241 = vpop.permute.xlu0 %240
      %242 = vset.pattern.permute.xlu0 0
      %243 = vperm.xlu0 %242, %v223
      %v244 = vpop.permute.xlu0 %243
      %245 = vset.pattern.permute.xlu0 0
      %246 = vperm.xlu0 %245, %v224
      %v247 = vpop.permute.xlu0 %246
      %248 = vset.pattern.permute.xlu0 0
      %249 = vperm.xlu0 %248, %v225
      %v250 = vpop.permute.xlu0 %249
      %vm251 = vcmp.eq.s32.totalorder %v235, %v232
      %vm252 = vcmp.eq.s32.totalorder %v238, %v232
      %vm253 = vcmp.eq.s32.totalorder %v241, %v232
      %vm254 = vcmp.eq.s32.totalorder %v244, %v232
      %vm255 = vcmp.eq.s32.totalorder %v247, %v232
      %vm256 = vcmp.eq.s32.totalorder %v250, %v232
      %v257 = vsel %vm251, 1, 0
      %v258 = vsel %vm252, 1, 0
      %v259 = vsel %vm253, 1, 0
      %v260 = vsel %vm254, 1, 0
      %v261 = vsel %vm255, 1, 0
      %v262 = vsel %vm256, 1, 0
      %v263 = vcvt.s32.f32 %v257
      %v264 = vcvt.s32.f32 %v258
      %v265 = vcvt.s32.f32 %v259
      %v266 = vcvt.s32.f32 %v260
      %v267 = vcvt.s32.f32 %v261
      %v268 = vcvt.s32.f32 %v262
      %269 = vset.pattern.permute.xlu0 1
      %270 = vperm.xlu0 %269, %v220
      %v271 = vpop.permute.xlu0 %270
      %272 = vset.pattern.permute.xlu0 1
      %273 = vperm.xlu0 %272, %v221
      %v274 = vpop.permute.xlu0 %273
      %275 = vset.pattern.permute.xlu0 1
      %276 = vperm.xlu0 %275, %v222
      %v277 = vpop.permute.xlu0 %276
      %278 = vset.pattern.permute.xlu0 1
      %279 = vperm.xlu0 %278, %v223
      %v280 = vpop.permute.xlu0 %279
      %281 = vset.pattern.permute.xlu0 1
      %282 = vperm.xlu0 %281, %v224
      %v283 = vpop.permute.xlu0 %282
      %284 = vset.pattern.permute.xlu0 1
      %285 = vperm.xlu0 %284, %v225
      %v286 = vpop.permute.xlu0 %285
      %vm287 = vcmp.eq.s32.totalorder %v271, %v232
      %vm288 = vcmp.eq.s32.totalorder %v274, %v232
      %vm289 = vcmp.eq.s32.totalorder %v277, %v232
      %vm290 = vcmp.eq.s32.totalorder %v280, %v232
      %vm291 = vcmp.eq.s32.totalorder %v283, %v232
      %vm292 = vcmp.eq.s32.totalorder %v286, %v232
      %v293 = vsel %vm287, 1, 0
      %v294 = vsel %vm288, 1, 0
      %v295 = vsel %vm289, 1, 0
      %v296 = vsel %vm290, 1, 0
      %v297 = vsel %vm291, 1, 0
      %v298 = vsel %vm292, 1, 0
      %v299 = vcvt.s32.f32 %v293
      %v300 = vcvt.s32.f32 %v294
      %v301 = vcvt.s32.f32 %v295
      %v302 = vcvt.s32.f32 %v296
      %v303 = vcvt.s32.f32 %v297
      %v304 = vcvt.s32.f32 %v298
      %305 = vset.pattern.permute.xlu0 2
      %306 = vperm.xlu0 %305, %v220
      %v307 = vpop.permute.xlu0 %306
      %308 = vset.pattern.permute.xlu0 2
      %309 = vperm.xlu0 %308, %v221
      %v310 = vpop.permute.xlu0 %309
      %311 = vset.pattern.permute.xlu0 2
      %312 = vperm.xlu0 %311, %v222
      %v313 = vpop.permute.xlu0 %312
      %314 = vset.pattern.permute.xlu0 2
      %315 = vperm.xlu0 %314, %v223
      %v316 = vpop.permute.xlu0 %315
      %317 = vset.pattern.permute.xlu0 2
      %318 = vperm.xlu0 %317, %v224
      %v319 = vpop.permute.xlu0 %318
      %320 = vset.pattern.permute.xlu0 2
      %321 = vperm.xlu0 %320, %v225
      %v322 = vpop.permute.xlu0 %321
      %vm323 = vcmp.eq.s32.totalorder %v307, %v232
      %vm324 = vcmp.eq.s32.totalorder %v310, %v232
      %vm325 = vcmp.eq.s32.totalorder %v313, %v232
      %vm326 = vcmp.eq.s32.totalorder %v316, %v232
      %vm327 = vcmp.eq.s32.totalorder %v319, %v232
      %vm328 = vcmp.eq.s32.totalorder %v322, %v232
      %v329 = vsel %vm323, 1, 0
      %v330 = vsel %vm324, 1, 0
      %v331 = vsel %vm325, 1, 0
      %v332 = vsel %vm326, 1, 0
      %v333 = vsel %vm327, 1, 0
      %v334 = vsel %vm328, 1, 0
      %v335 = vcvt.s32.f32 %v329
      %v336 = vcvt.s32.f32 %v330
      %v337 = vcvt.s32.f32 %v331
      %v338 = vcvt.s32.f32 %v332
      %v339 = vcvt.s32.f32 %v333
      %v340 = vcvt.s32.f32 %v334
      %341 = vset.pattern.permute.xlu0 3
      %342 = vperm.xlu0 %341, %v220
      %v343 = vpop.permute.xlu0 %342
      %344 = vset.pattern.permute.xlu0 3
      %345 = vperm.xlu0 %344, %v221
      %v346 = vpop.permute.xlu0 %345
      %vm347 = vcmp.eq.s32.totalorder %v343, %v232
      %vm348 = vcmp.eq.s32.totalorder %v346, %v232
      %v349 = vsel %vm347, 1, 0
      %v350 = vsel %vm348, 1, 0
      %v351 = vcvt.s32.f32 %v349
      %v352 = vcvt.s32.f32 %v350
      %v353 = vperm.slane %v230, 0
      %vm354 = vcmask 261120
      %v356 = vsel %vm354, %v218, 0
      %v359 = vsel %vm354, %v219, 0
      %361 = vmatpush.msra.mxu0 0.0
      %362 = vmatpush.msra.mxu0 0.0
      %363 = vmatpush.msra.mxu0 0.0
      %364 = vmatpush.msra.mxu0 0.0
      %365 = vmatpush.msra.mxu0 0.0
      %366 = vmatpush.msra.mxu0 0.0
      %367 = vmatpush.msra.mxu0 0.0
      %368 = vmatpush.msra.mxu0 0.0
      %369 = vmatpush.msra.mxu0 0.0
      %370 = vmatpush.msra.mxu0 0.0
      %371 = vmatpush.msra.mxu0 0.0
      %372 = vmatpush.msra.mxu0 0.0
      %373 = vmatpush.msra.mxu0 %v229
      %374 = vmatpush.msra.mxu0 %v228
      %375 = vmatpush.msra.mxu0 %v227
      %376 = vmatpush.msra.mxu0 %v226
      %377 = vmatmul.f32.gmra.mxu0 %v356
      %v378 = vpop.f32.mrf.mxu0
      %v379 = vadd.f32 %v353, %v378
      %380 = vmatmul.f32.gmra.mxu0 %v359
      %v381 = vpop.f32.mrf.mxu0
      %v382 = vadd.f32 %v353, %v381
      %383 = vdwg.mxu0
      %385 = vset.pattern.permute.xlu0 0
      %386 = vperm.xlu0 %385, %v351
      %v387 = vpop.permute.xlu0 %386
      %390 = vset.pattern.permute.xlu0 0
      %391 = vperm.xlu0 %390, %v352
      %v392 = vpop.permute.xlu0 %391
      %v394 = vmul.f32 %v387, %v379
      %v395 = vmul.f32 %v392, %v382
      %396 = vset.pattern.permute.xlu0 1
      %397 = vperm.xlu0 %396, %v351
      %v398 = vpop.permute.xlu0 %397
      %400 = vset.pattern.permute.xlu0 1
      %401 = vperm.xlu0 %400, %v352
      %v402 = vpop.permute.xlu0 %401
      %v404 = vmul.f32 %v398, %v379
      %v405 = vmul.f32 %v402, %v382
      %408 = vrot.lane.b32.xlu0 %v404, 124
      %v409 = vpop.permute.xlu0 %408
      %410 = vrot.lane.b32.xlu0 %v405, 124
      %v411 = vpop.permute.xlu0 %410
      %v414 = vadd.f32 %v394, %v409
      %v415 = vadd.f32 %v395, %v411
      %vm416 = vcmask 130048
      %v418 = vsel %vm416, %v263, 0
      %v421 = vsel %vm416, %v264, 0
      %v424 = vsel %vm416, %v265, 0
      %v427 = vsel %vm416, %v266, 0
      %v430 = vsel %vm416, %v267, 0
      %v433 = vsel %vm416, %v268, 0
      %435 = vmatpush.msra.mxu0 0.0
      %436 = vmatpush.msra.mxu0 0.0
      %437 = vmatpush.msra.mxu0 0.0
      %438 = vmatpush.msra.mxu0 0.0
      %439 = vmatpush.msra.mxu0 0.0
      %440 = vmatpush.msra.mxu0 0.0
      %441 = vmatpush.msra.mxu0 0.0
      %442 = vmatpush.msra.mxu0 0.0
      %443 = vmatpush.msra.mxu0 0.0
      %444 = vmatpush.msra.mxu0 0.0
      %445 = vmatpush.msra.mxu0 0.0
      %446 = vmatpush.msra.mxu0 0.0
      %447 = vmatpush.msra.mxu0 0.0
      %448 = vmatpush.msra.mxu0 0.0
      %449 = vmatpush.msra.mxu0 %v415
      %450 = vmatpush.msra.mxu0 %v414
      %451 = vmatmul.f32.gmra.mxu0 %v418
      %v452 = vpop.f32.mrf.mxu0
      %v453 = vadd.f32 0.0, %v452
      %454 = vmatmul.f32.gmra.mxu0 %v421
      %v455 = vpop.f32.mrf.mxu0
      %v456 = vadd.f32 0.0, %v455
      %457 = vmatmul.f32.gmra.mxu0 %v424
      %v458 = vpop.f32.mrf.mxu0
      %v459 = vadd.f32 0.0, %v458
      %460 = vmatmul.f32.gmra.mxu0 %v427
      %v461 = vpop.f32.mrf.mxu0
      %v462 = vadd.f32 0.0, %v461
      %463 = vmatmul.f32.gmra.mxu0 %v430
      %v464 = vpop.f32.mrf.mxu0
      %v465 = vadd.f32 0.0, %v464
      %466 = vmatmul.f32.gmra.mxu0 %v433
      %v467 = vpop.f32.mrf.mxu0
      %v468 = vadd.f32 0.0, %v467
      %469 = vdwg.mxu0
      %v471 = vsel %vm416, %v299, 0
      %v474 = vsel %vm416, %v300, 0
      %v477 = vsel %vm416, %v301, 0
      %v480 = vsel %vm416, %v302, 0
      %v483 = vsel %vm416, %v303, 0
      %v486 = vsel %vm416, %v304, 0
      %488 = vmatpush.msra.mxu0 0.0
      %489 = vmatpush.msra.mxu0 0.0
      %490 = vmatpush.msra.mxu0 0.0
      %491 = vmatpush.msra.mxu0 0.0
      %492 = vmatpush.msra.mxu0 0.0
      %493 = vmatpush.msra.mxu0 0.0
      %494 = vmatpush.msra.mxu0 0.0
      %495 = vmatpush.msra.mxu0 0.0
      %496 = vmatpush.msra.mxu0 0.0
      %497 = vmatpush.msra.mxu0 0.0
      %498 = vmatpush.msra.mxu0 0.0
      %499 = vmatpush.msra.mxu0 0.0
      %500 = vmatpush.msra.mxu0 0.0
      %501 = vmatpush.msra.mxu0 0.0
      %502 = vmatpush.msra.mxu0 %v415
      %503 = vmatpush.msra.mxu0 %v414
      %504 = vmatmul.f32.gmra.mxu0 %v471
      %v505 = vpop.f32.mrf.mxu0
      %v506 = vadd.f32 0.0, %v505
      %507 = vmatmul.f32.gmra.mxu0 %v474
      %v508 = vpop.f32.mrf.mxu0
      %v509 = vadd.f32 0.0, %v508
      %510 = vmatmul.f32.gmra.mxu0 %v477
      %v511 = vpop.f32.mrf.mxu0
      %v512 = vadd.f32 0.0, %v511
      %513 = vmatmul.f32.gmra.mxu0 %v480
      %v514 = vpop.f32.mrf.mxu0
      %v515 = vadd.f32 0.0, %v514
      %516 = vmatmul.f32.gmra.mxu0 %v483
      %v517 = vpop.f32.mrf.mxu0
      %v518 = vadd.f32 0.0, %v517
      %519 = vmatmul.f32.gmra.mxu0 %v486
      %v520 = vpop.f32.mrf.mxu0
      %v521 = vadd.f32 0.0, %v520
      %522 = vdwg.mxu0
      %v524 = vrot.slane %v230, 1
      %vm525 = vcmask 15360
      %v527 = vsel %vm525, %v335, 0
      %v530 = vsel %vm525, %v336, 0
      %v533 = vsel %vm525, %v337, 0
      %v536 = vsel %vm525, %v338, 0
      %v539 = vsel %vm525, %v339, 0
      %v542 = vsel %vm525, %v340, 0
      %vm544 = vcmask 1041408
      %v545 = vsel %vm544, %v524, 0
      %547 = vmatpush.msra.mxu0 0.0
      %548 = vmatpush.msra.mxu0 0.0
      %549 = vmatpush.msra.mxu0 0.0
      %550 = vmatpush.msra.mxu0 0.0
      %551 = vmatpush.msra.mxu0 0.0
      %552 = vmatpush.msra.mxu0 0.0
      %553 = vmatpush.msra.mxu0 0.0
      %554 = vmatpush.msra.mxu0 0.0
      %555 = vmatpush.msra.mxu0 0.0
      %556 = vmatpush.msra.mxu0 0.0
      %557 = vmatpush.msra.mxu0 0.0
      %558 = vmatpush.msra.mxu0 0.0
      %559 = vmatpush.msra.mxu0 0.0
      %560 = vmatpush.msra.mxu0 0.0
      %561 = vmatpush.msra.mxu0 0.0
      %562 = vmatpush.msra.mxu0 %v545
      %563 = vmatmul.f32.gmra.mxu0 %v527
      %v564 = vpop.f32.mrf.mxu0
      %v565 = vadd.f32 0.0, %v564
      %566 = vmatmul.f32.gmra.mxu0 %v530
      %v567 = vpop.f32.mrf.mxu0
      %v568 = vadd.f32 0.0, %v567
      %569 = vmatmul.f32.gmra.mxu0 %v533
      %v570 = vpop.f32.mrf.mxu0
      %v571 = vadd.f32 0.0, %v570
      %572 = vmatmul.f32.gmra.mxu0 %v536
      %v573 = vpop.f32.mrf.mxu0
      %v574 = vadd.f32 0.0, %v573
      %575 = vmatmul.f32.gmra.mxu0 %v539
      %v576 = vpop.f32.mrf.mxu0
      %v577 = vadd.f32 0.0, %v576
      %578 = vmatmul.f32.gmra.mxu0 %v542
      %v579 = vpop.f32.mrf.mxu0
      %v580 = vadd.f32 0.0, %v579
      %581 = vdwg.mxu0
      %v582 = vmul.f32 %v453, %v565
      %v583 = vmul.f32 %v456, %v568
      %v584 = vmul.f32 %v459, %v571
      %v585 = vmul.f32 %v462, %v574
      %v586 = vmul.f32 %v465, %v577
      %v587 = vmul.f32 %v468, %v580
      %594 = vrot.lane.b32.xlu0 %v582, 1
      %v595 = vpop.permute.xlu0 %594
      %596 = vrot.lane.b32.xlu0 %v583, 1
      %v597 = vpop.permute.xlu0 %596
      %598 = vrot.lane.b32.xlu0 %v584, 1
      %v599 = vpop.permute.xlu0 %598
      %600 = vrot.lane.b32.xlu0 %v585, 1
      %v601 = vpop.permute.xlu0 %600
      %602 = vrot.lane.b32.xlu0 %v586, 1
      %v603 = vpop.permute.xlu0 %602
      %604 = vrot.lane.b32.xlu0 %v587, 1
      %v605 = vpop.permute.xlu0 %604
      %v612 = vmul.f32 %v506, %v595
      %v613 = vmul.f32 %v509, %v597
      %v614 = vmul.f32 %v512, %v599
      %v615 = vmul.f32 %v515, %v601
      %v616 = vmul.f32 %v518, %v603
      %v617 = vmul.f32 %v521, %v605
      %624 = vrot.lane.b32.xlu0 %v565, 127
      %v625 = vpop.permute.xlu0 %624
      %626 = vrot.lane.b32.xlu0 %v568, 127
      %v627 = vpop.permute.xlu0 %626
      %628 = vrot.lane.b32.xlu0 %v571, 127
      %v629 = vpop.permute.xlu0 %628
      %630 = vrot.lane.b32.xlu0 %v574, 127
      %v631 = vpop.permute.xlu0 %630
      %632 = vrot.lane.b32.xlu0 %v577, 127
      %v633 = vpop.permute.xlu0 %632
      %634 = vrot.lane.b32.xlu0 %v580, 127
      %v635 = vpop.permute.xlu0 %634
      %v642 = vmul.f32 %v612, %v625
      %v643 = vmul.f32 %v613, %v627
      %v644 = vmul.f32 %v614, %v629
      %v645 = vmul.f32 %v615, %v631
      %v646 = vmul.f32 %v616, %v633
      %v647 = vmul.f32 %v617, %v635
      %648 = vrot.lane.b32.xlu0 %v565, 1
      %v649 = vpop.permute.xlu0 %648
      %650 = vrot.lane.b32.xlu0 %v568, 1
      %v651 = vpop.permute.xlu0 %650
      %652 = vrot.lane.b32.xlu0 %v571, 1
      %v653 = vpop.permute.xlu0 %652
      %654 = vrot.lane.b32.xlu0 %v574, 1
      %v655 = vpop.permute.xlu0 %654
      %656 = vrot.lane.b32.xlu0 %v577, 1
      %v657 = vpop.permute.xlu0 %656
      %658 = vrot.lane.b32.xlu0 %v580, 1
      %v659 = vpop.permute.xlu0 %658
      %v666 = vmul.f32 %v453, %v649
      %v667 = vmul.f32 %v456, %v651
      %v668 = vmul.f32 %v459, %v653
      %v669 = vmul.f32 %v462, %v655
      %v670 = vmul.f32 %v465, %v657
      %v671 = vmul.f32 %v468, %v659
      %vm672 = vcmp.gt.f32.partialorder %v299, 0.0
      %vm673 = vcmp.gt.f32.partialorder %v300, 0.0
      %vm674 = vcmp.gt.f32.partialorder %v301, 0.0
      %vm675 = vcmp.gt.f32.partialorder %v302, 0.0
      %vm676 = vcmp.gt.f32.partialorder %v303, 0.0
      %vm677 = vcmp.gt.f32.partialorder %v304, 0.0
      %679 = vset.pattern.permute.xlu0 1
      %680 = vperm.xlu0 %679, %v642
      %v681 = vpop.permute.xlu0 %680
      %684 = vset.pattern.permute.xlu0 1
      %685 = vperm.xlu0 %684, %v643
      %v686 = vpop.permute.xlu0 %685
      %689 = vset.pattern.permute.xlu0 1
      %690 = vperm.xlu0 %689, %v644
      %v691 = vpop.permute.xlu0 %690
      %694 = vset.pattern.permute.xlu0 1
      %695 = vperm.xlu0 %694, %v645
      %v696 = vpop.permute.xlu0 %695
      %699 = vset.pattern.permute.xlu0 1
      %700 = vperm.xlu0 %699, %v646
      %v701 = vpop.permute.xlu0 %700
      %704 = vset.pattern.permute.xlu0 1
      %705 = vperm.xlu0 %704, %v647
      %v706 = vpop.permute.xlu0 %705
      %v708 = vsel %vm672, %v681, -1e+30
      %v709 = vsel %vm673, %v686, -1e+30
      %v710 = vsel %vm674, %v691, -1e+30
      %v711 = vsel %vm675, %v696, -1e+30
      %v712 = vsel %vm676, %v701, -1e+30
      %v713 = vsel %vm677, %v706, -1e+30
      %v714 = vsel %vm416, %v708, -inf
      %v715 = vsel %vm416, %v709, -inf
      %v716 = vsel %vm416, %v710, -inf
      %v717 = vsel %vm416, %v711, -inf
      %v718 = vsel %vm416, %v712, -inf
      %v719 = vmax.f32 %v714, %v718
      %v720 = vsel %vm416, %v713, -inf
      %v721 = vmax.f32 %v715, %v720
      %v722 = vmax.f32 %v719, %v721
      %v723 = vmax.f32 %v716, %v717
      %v724 = vmax.f32 %v722, %v723
      %v725 = vrot.slane %v724, 4
      %v726 = vmax.f32 %v724, %v725
      %v727 = vrot.slane %v726, 2
      %v728 = vmax.f32 %v726, %v727
      %v729 = vrot.slane %v728, 1
      %v730 = vmax.f32 %v728, %v729
      %v731 = vlaneseq
      %v732 = vshrl.u32 %v731, 7
      %734 = vset.pattern.permute.xlu0 %v732
      %735 = vperm.xlu0 %734, %v730
      %v736 = vpop.permute.xlu0 %735
      %v737 = vlaneseq
      %v738 = vshrl.u32 %v737, 7
      %v739 = vadd.s32 %v738, 8
      %740 = vset.pattern.permute.xlu0 %v739
      %741 = vperm.xlu0 %740, %v730
      %v742 = vpop.permute.xlu0 %741
      %743 = vmatpush.msra.mxu0 0.0
      %744 = vmatpush.msra.mxu0 0.0
      %745 = vmatpush.msra.mxu0 0.0
      %746 = vmatpush.msra.mxu0 0.0
      %747 = vmatpush.msra.mxu0 0.0
      %748 = vmatpush.msra.mxu0 0.0
      %749 = vmatpush.msra.mxu0 0.0
      %750 = vmatpush.msra.mxu0 0.0
      %751 = vmatpush.msra.mxu0 0.0
      %752 = vmatpush.msra.mxu0 0.0
      %753 = vmatpush.msra.mxu0 0.0
      %754 = vmatpush.msra.mxu0 0.0
      %755 = vmatpush.msra.mxu0 0.0
      %756 = vmatpush.msra.mxu0 0.0
      %757 = vmatpush.msra.mxu0 %v742
      %758 = vmatpush.msra.mxu0 %v736
      %759 = vmatmul.f32.gmra.mxu0 %v471
      %v760 = vpop.f32.mrf.mxu0
      %v761 = vadd.f32 0.0, %v760
      %762 = vmatmul.f32.gmra.mxu0 %v474
      %v763 = vpop.f32.mrf.mxu0
      %v764 = vadd.f32 0.0, %v763
      %765 = vmatmul.f32.gmra.mxu0 %v477
      %v766 = vpop.f32.mrf.mxu0
      %v767 = vadd.f32 0.0, %v766
      %768 = vmatmul.f32.gmra.mxu0 %v480
      %v769 = vpop.f32.mrf.mxu0
      %v770 = vadd.f32 0.0, %v769
      %771 = vmatmul.f32.gmra.mxu0 %v483
      %v772 = vpop.f32.mrf.mxu0
      %v773 = vadd.f32 0.0, %v772
      %774 = vmatmul.f32.gmra.mxu0 %v486
      %v775 = vpop.f32.mrf.mxu0
      %v776 = vadd.f32 0.0, %v775
      %777 = vdwg.mxu0
      %784 = vrot.lane.b32.xlu0 %v761, 1
      %v785 = vpop.permute.xlu0 %784
      %786 = vrot.lane.b32.xlu0 %v764, 1
      %v787 = vpop.permute.xlu0 %786
      %788 = vrot.lane.b32.xlu0 %v767, 1
      %v789 = vpop.permute.xlu0 %788
      %790 = vrot.lane.b32.xlu0 %v770, 1
      %v791 = vpop.permute.xlu0 %790
      %792 = vrot.lane.b32.xlu0 %v773, 1
      %v793 = vpop.permute.xlu0 %792
      %794 = vrot.lane.b32.xlu0 %v776, 1
      %v795 = vpop.permute.xlu0 %794
      %v802 = vsub.f32 %v642, %v785
      %v803 = vsub.f32 %v643, %v787
      %v804 = vsub.f32 %v644, %v789
      %v805 = vsub.f32 %v645, %v791
      %v806 = vsub.f32 %v646, %v793
      %v807 = vsub.f32 %v647, %v795
      %v808 = vmul.f32 %v802, 1.442695
      %v809 = vpow.pop %v808
      %v810 = vmul.f32 %v803, 1.442695
      %v811 = vpow.pop %v810
      %v812 = vmul.f32 %v804, 1.442695
      %v813 = vpow.pop %v812
      %v814 = vmul.f32 %v805, 1.442695
      %v815 = vpow.pop %v814
      %v816 = vmul.f32 %v806, 1.442695
      %v817 = vpow.pop %v816
      %v818 = vmul.f32 %v807, 1.442695
      %v819 = vpow.pop %v818
      %820 = vxpose.xlu0.b32.start [1/16] %v299, 128
      %821 = vxpose.xlu0.b32.cont [2/16] %v300, 128
      %822 = vxpose.xlu0.b32.cont [3/16] %v301, 128
      %823 = vxpose.xlu0.b32.cont [4/16] %v302, 128
      %824 = vxpose.xlu0.b32.cont [5/16] %v303, 128
      %825 = vxpose.xlu0.b32.cont [6/16] %v304, 128
      %826 = vxpose.xlu0.b32.cont [7/16] 0.0, 128
      %827 = vxpose.xlu0.b32.cont [8/16] 0.0, 128
      %828 = vxpose.xlu0.b32.cont [9/16] 0.0, 128
      %829 = vxpose.xlu0.b32.cont [10/16] 0.0, 128
      %830 = vxpose.xlu0.b32.cont [11/16] 0.0, 128
      %831 = vxpose.xlu0.b32.cont [12/16] 0.0, 128
      %832 = vxpose.xlu0.b32.cont [13/16] 0.0, 128
      %833 = vxpose.xlu0.b32.cont [14/16] 0.0, 128
      %834 = vxpose.xlu0.b32.cont [15/16] 0.0, 128
      %835 = vxpose.xlu0.b32.end [16/16] 0.0, 128
      %v836 = vpop.trf.xlu0
      %v837 = vpop.trf.xlu0
      %v838 = vpop.trf.xlu0
      %v839 = vpop.trf.xlu0
      %v840 = vpop.trf.xlu0
      %v841 = vpop.trf.xlu0
      %v842 = vpop.trf.xlu0
      %v843 = vpop.trf.xlu0
      %v844 = vpop.trf.xlu0
      %v845 = vpop.trf.xlu0
      %v846 = vpop.trf.xlu0
      %v847 = vpop.trf.xlu0
      %v848 = vpop.trf.xlu0
      %v849 = vpop.trf.xlu0
      %v850 = vpop.trf.xlu0
      %v851 = vpop.trf.xlu0
      %858 = vrot.lane.b32.xlu0 %v809, 127
      %v859 = vpop.permute.xlu0 %858
      %860 = vrot.lane.b32.xlu0 %v811, 127
      %v861 = vpop.permute.xlu0 %860
      %862 = vrot.lane.b32.xlu0 %v813, 127
      %v863 = vpop.permute.xlu0 %862
      %864 = vrot.lane.b32.xlu0 %v815, 127
      %v865 = vpop.permute.xlu0 %864
      %866 = vrot.lane.b32.xlu0 %v817, 127
      %v867 = vpop.permute.xlu0 %866
      %868 = vrot.lane.b32.xlu0 %v819, 127
      %v869 = vpop.permute.xlu0 %868
      %vm876 = vcmask 392192
      %v878 = vsel %vm876, %v836, 0
      %v881 = vsel %vm876, %v837, 0
      %883 = vmatpush.msra.mxu0 0.0
      %884 = vmatpush.msra.mxu0 0.0
      %885 = vmatpush.msra.mxu0 0.0
      %886 = vmatpush.msra.mxu0 0.0
      %887 = vmatpush.msra.mxu0 0.0
      %888 = vmatpush.msra.mxu0 0.0
      %889 = vmatpush.msra.mxu0 0.0
      %890 = vmatpush.msra.mxu0 0.0
      %891 = vmatpush.msra.mxu0 0.0
      %892 = vmatpush.msra.mxu0 0.0
      %893 = vmatpush.msra.mxu0 %v869
      %894 = vmatpush.msra.mxu0 %v867
      %895 = vmatpush.msra.mxu0 %v865
      %896 = vmatpush.msra.mxu0 %v863
      %897 = vmatpush.msra.mxu0 %v861
      %898 = vmatpush.msra.mxu0 %v859
      %899 = vmatmul.f32.gmra.mxu0 %v878
      %v900 = vpop.f32.mrf.mxu0
      %v901 = vadd.f32 0.0, %v900
      %902 = vmatmul.f32.gmra.mxu0 %v881
      %v903 = vpop.f32.mrf.mxu0
      %v904 = vadd.f32 0.0, %v903
      %905 = vdwg.mxu0
      %912 = vrot.lane.b32.xlu0 %v666, 127
      %v913 = vpop.permute.xlu0 %912
      %914 = vrot.lane.b32.xlu0 %v667, 127
      %v915 = vpop.permute.xlu0 %914
      %916 = vrot.lane.b32.xlu0 %v668, 127
      %v917 = vpop.permute.xlu0 %916
      %918 = vrot.lane.b32.xlu0 %v669, 127
      %v919 = vpop.permute.xlu0 %918
      %920 = vrot.lane.b32.xlu0 %v670, 127
      %v921 = vpop.permute.xlu0 %920
      %922 = vrot.lane.b32.xlu0 %v671, 127
      %v923 = vpop.permute.xlu0 %922
      %v930 = vmul.f32 %v809, %v913
      %v931 = vmul.f32 %v811, %v915
      %v932 = vmul.f32 %v813, %v917
      %v933 = vmul.f32 %v815, %v919
      %v934 = vmul.f32 %v817, %v921
      %v935 = vmul.f32 %v819, %v923
      %942 = vrot.lane.b32.xlu0 %v930, 127
      %v943 = vpop.permute.xlu0 %942
      %944 = vrot.lane.b32.xlu0 %v931, 127
      %v945 = vpop.permute.xlu0 %944
      %946 = vrot.lane.b32.xlu0 %v932, 127
      %v947 = vpop.permute.xlu0 %946
      %948 = vrot.lane.b32.xlu0 %v933, 127
      %v949 = vpop.permute.xlu0 %948
      %950 = vrot.lane.b32.xlu0 %v934, 127
      %v951 = vpop.permute.xlu0 %950
      %952 = vrot.lane.b32.xlu0 %v935, 127
      %v953 = vpop.permute.xlu0 %952
      %960 = vmatpush.msra.mxu0 0.0
      %961 = vmatpush.msra.mxu0 0.0
      %962 = vmatpush.msra.mxu0 0.0
      %963 = vmatpush.msra.mxu0 0.0
      %964 = vmatpush.msra.mxu0 0.0
      %965 = vmatpush.msra.mxu0 0.0
      %966 = vmatpush.msra.mxu0 0.0
      %967 = vmatpush.msra.mxu0 0.0
      %968 = vmatpush.msra.mxu0 0.0
      %969 = vmatpush.msra.mxu0 0.0
      %970 = vmatpush.msra.mxu0 %v953
      %971 = vmatpush.msra.mxu0 %v951
      %972 = vmatpush.msra.mxu0 %v949
      %973 = vmatpush.msra.mxu0 %v947
      %974 = vmatpush.msra.mxu0 %v945
      %975 = vmatpush.msra.mxu0 %v943
      %976 = vmatmul.f32.gmra.mxu0 %v878
      %v977 = vpop.f32.mrf.mxu0
      %v978 = vadd.f32 0.0, %v977
      %979 = vmatmul.f32.gmra.mxu0 %v881
      %v980 = vpop.f32.mrf.mxu0
      %v981 = vadd.f32 0.0, %v980
      %982 = vdwg.mxu0
      %vm983 = vcmp.gt.f32.partialorder %v901, 0.0
      %vm984 = vcmp.gt.f32.partialorder %v904, 0.0
      %v985 = vsel %vm983, %v901, 1.0
      %v986 = vsel %vm984, %v904, 1.0
      %v987 = vrcp.pop %v985
      %v988 = vmul.f32 %v985, %v987
      %v989 = vsub.f32 1.0, %v988
      %v990 = vmul.f32 %v987, %v989
      %v991 = vadd.f32 %v987, %v990
      %vm992 = vweird.f32 %v985
      %vm993 = vweird.f32 %v987
      %vm994 = vmor %vm992, %vm993
      %v995 = vsel %vm994, %v987, %v991
      %v996 = vand.u32 2147483647, %v985
      %vm997 = vcmp.eq.f32.partialorder %v996, 8.507059e+37
      %v998 = vand.u32 %v985, 2147483648
      %v999 = vor.u32 1.1754944e-38, %v998
      %v1000 = vsel %vm997, %v999, %v995
      %v1001 = vmul.f32 %v978, %v1000
      %v1002 = vrcp.pop %v986
      %v1003 = vmul.f32 %v986, %v1002
      %v1004 = vsub.f32 1.0, %v1003
      %v1005 = vmul.f32 %v1002, %v1004
      %v1006 = vadd.f32 %v1002, %v1005
      %vm1007 = vweird.f32 %v986
      %vm1008 = vweird.f32 %v1002
      %vm1009 = vmor %vm1007, %vm1008
      %v1010 = vsel %vm1009, %v1002, %v1006
      %v1011 = vand.u32 2147483647, %v986
      %vm1012 = vcmp.eq.f32.partialorder %v1011, 8.507059e+37
      %v1013 = vand.u32 %v986, 2147483648
      %v1014 = vor.u32 1.1754944e-38, %v1013
      %v1015 = vsel %vm1012, %v1014, %v1010
      %v1016 = vmul.f32 %v981, %v1015
      %v1017 = vrot.slane %v230, 3
      %v1018 = vsel %vm525, %v351, 0
      %v1020 = vsel %vm525, %v352, 0
      %v1022 = vsel %vm544, %v1017, 0
      %1024 = vmatpush.msra.mxu0 0.0
      %1025 = vmatpush.msra.mxu0 0.0
      %1026 = vmatpush.msra.mxu0 0.0
      %1027 = vmatpush.msra.mxu0 0.0
      %1028 = vmatpush.msra.mxu0 0.0
      %1029 = vmatpush.msra.mxu0 0.0
      %1030 = vmatpush.msra.mxu0 0.0
      %1031 = vmatpush.msra.mxu0 0.0
      %1032 = vmatpush.msra.mxu0 0.0
      %1033 = vmatpush.msra.mxu0 0.0
      %1034 = vmatpush.msra.mxu0 0.0
      %1035 = vmatpush.msra.mxu0 0.0
      %1036 = vmatpush.msra.mxu0 0.0
      %1037 = vmatpush.msra.mxu0 0.0
      %1038 = vmatpush.msra.mxu0 0.0
      %1039 = vmatpush.msra.mxu0 %v1022
      %1040 = vmatmul.f32.gmra.mxu0 %v1018
      %v1041 = vpop.f32.mrf.mxu0
      %v1042 = vadd.f32 0.0, %v1041
      %1043 = vmatmul.f32.gmra.mxu0 %v1020
      %v1044 = vpop.f32.mrf.mxu0
      %v1045 = vadd.f32 0.0, %v1044
      %1046 = vdwg.mxu0
      %v1047 = vmul.f32 %v1001, 0.5
      %v1048 = vmul.f32 %v1016, 0.5
      %v1049 = vmul.f32 %v1001, 0.70710677
      %v1050 = vmul.f32 %v1016, 0.70710677
      %vm1051 = vcmp.ge.f32.partialorder %v1049, 0.0
      %vm1052 = vcmp.ge.f32.partialorder %v1050, 0.0
      %v1053 = vsel %vm1051, 1.0, -1.0
      %v1054 = vsel %vm1052, 1.0, -1.0
      %v1055 = vand.u32 2147483647, %v1049
      %v1056 = vand.u32 2147483647, %v1050
      %v1057 = vmul.f32 %v1055, 0.3275911
      %v1058 = vmul.f32 %v1056, 0.3275911
      %v1059 = vadd.f32 %v1057, 1.0
      %v1060 = vadd.f32 %v1058, 1.0
      %v1061 = vrcp.pop %v1059
      %v1062 = vmul.f32 %v1059, %v1061
      %v1063 = vsub.f32 1.0, %v1062
      %v1064 = vmul.f32 %v1061, %v1063
      %v1065 = vadd.f32 %v1061, %v1064
      %vm1066 = vweird.f32 %v1059
      %vm1067 = vweird.f32 %v1061
      %vm1068 = vmor %vm1066, %vm1067
      %v1069 = vsel %vm1068, %v1061, %v1065
      %v1070 = vand.u32 2147483647, %v1059
      %vm1071 = vcmp.eq.f32.partialorder %v1070, 8.507059e+37
      %v1072 = vand.u32 %v1059, 2147483648
      %v1073 = vor.u32 1.1754944e-38, %v1072
      %v1074 = vsel %vm1071, %v1073, %v1069
      %v1075 = vmul.f32 1.0, %v1074
      %v1076 = vrcp.pop %v1060
      %v1077 = vmul.f32 %v1060, %v1076
      %v1078 = vsub.f32 1.0, %v1077
      %v1079 = vmul.f32 %v1076, %v1078
      %v1080 = vadd.f32 %v1076, %v1079
      %vm1081 = vweird.f32 %v1060
      %vm1082 = vweird.f32 %v1076
      %vm1083 = vmor %vm1081, %vm1082
      %v1084 = vsel %vm1083, %v1076, %v1080
      %v1085 = vand.u32 2147483647, %v1060
      %vm1086 = vcmp.eq.f32.partialorder %v1085, 8.507059e+37
      %v1087 = vand.u32 %v1060, 2147483648
      %v1088 = vor.u32 1.1754944e-38, %v1087
      %v1089 = vsel %vm1086, %v1088, %v1084
      %v1090 = vmul.f32 1.0, %v1089
      %v1091 = vmul.f32 %v1075, 1.0614054
      %v1092 = vmul.f32 %v1090, 1.0614054
      %v1093 = vadd.f32 %v1091, -1.4531521
      %v1094 = vadd.f32 %v1092, -1.4531521
      %v1095 = vmul.f32 %v1093, %v1075
      %v1096 = vmul.f32 %v1094, %v1090
      %v1097 = vadd.f32 %v1095, 1.4214138
      %v1098 = vadd.f32 %v1096, 1.4214138
      %v1099 = vmul.f32 %v1097, %v1075
      %v1100 = vmul.f32 %v1098, %v1090
      %v1101 = vadd.f32 %v1099, -0.28449672
      %v1102 = vadd.f32 %v1100, -0.28449672
      %v1103 = vmul.f32 %v1101, %v1075
      %v1104 = vmul.f32 %v1102, %v1090
      %v1105 = vadd.f32 %v1103, 0.2548296
      %v1106 = vadd.f32 %v1104, 0.2548296
      %v1107 = vmul.f32 %v1105, %v1075
      %v1108 = vmul.f32 %v1106, %v1090
      %v1109 = vsub.f32 0.0, %v1055
      %v1110 = vsub.f32 0.0, %v1056
      %v1111 = vmul.f32 %v1109, %v1055
      %v1112 = vmul.f32 %v1110, %v1056
      %v1113 = vmul.f32 %v1111, 1.442695
      %v1114 = vpow.pop %v1113
      %v1115 = vmul.f32 %v1112, 1.442695
      %v1116 = vpow.pop %v1115
      %v1117 = vmul.f32 %v1107, %v1114
      %v1118 = vmul.f32 %v1108, %v1116
      %v1119 = vsub.f32 1.0, %v1117
      %v1120 = vsub.f32 1.0, %v1118
      %v1121 = vmul.f32 %v1053, %v1119
      %v1122 = vmul.f32 %v1054, %v1120
      %v1123 = vadd.f32 %v1121, 1.0
      %v1124 = vadd.f32 %v1122, 1.0
      %v1125 = vmul.f32 %v1047, %v1123
      %v1126 = vmul.f32 %v1048, %v1124
      %v1127 = vmul.f32 %v1125, %v1042
      %v1128 = vmul.f32 %v1126, %v1045
      %1131 = vrot.lane.b32.xlu0 %v1042, 127
      %v1132 = vpop.permute.xlu0 %1131
      %1133 = vrot.lane.b32.xlu0 %v1045, 127
      %v1134 = vpop.permute.xlu0 %1133
      %v1137 = vadd.f32 %v1127, %v1132
      %v1138 = vadd.f32 %v1128, %v1134
      %v1139 = vxor.u32 %v1042, 2147483648
      %v1140 = vxor.u32 %v1045, 2147483648
      %v1141 = vmul.f32 %v1139, 1.442695
      %v1142 = vpow.pop %v1141
      %v1143 = vmul.f32 %v1140, 1.442695
      %v1144 = vpow.pop %v1143
      %v1145 = vadd.f32 %v1142, 1.0
      %v1146 = vadd.f32 %v1144, 1.0
      %v1147 = vrcp.pop %v1145
      %v1148 = vmul.f32 %v1145, %v1147
      %v1149 = vsub.f32 1.0, %v1148
      %v1150 = vmul.f32 %v1147, %v1149
      %v1151 = vadd.f32 %v1147, %v1150
      %vm1152 = vweird.f32 %v1145
      %vm1153 = vweird.f32 %v1147
      %vm1154 = vmor %vm1152, %vm1153
      %v1155 = vsel %vm1154, %v1147, %v1151
      %v1156 = vand.u32 2147483647, %v1145
      %vm1157 = vcmp.eq.f32.partialorder %v1156, 8.507059e+37
      %v1158 = vand.u32 %v1145, 2147483648
      %v1159 = vor.u32 1.1754944e-38, %v1158
      %v1160 = vsel %vm1157, %v1159, %v1155
      %v1161 = vmul.f32 1.0, %v1160
      %v1162 = vrcp.pop %v1146
      %v1163 = vmul.f32 %v1146, %v1162
      %v1164 = vsub.f32 1.0, %v1163
      %v1165 = vmul.f32 %v1162, %v1164
      %v1166 = vadd.f32 %v1162, %v1165
      %vm1167 = vweird.f32 %v1146
      %vm1168 = vweird.f32 %v1162
      %vm1169 = vmor %vm1167, %vm1168
      %v1170 = vsel %vm1169, %v1162, %v1166
      %v1171 = vand.u32 2147483647, %v1146
      %vm1172 = vcmp.eq.f32.partialorder %v1171, 8.507059e+37
      %v1173 = vand.u32 %v1146, 2147483648
      %v1174 = vor.u32 1.1754944e-38, %v1173
      %v1175 = vsel %vm1172, %v1174, %v1170
      %v1176 = vmul.f32 1.0, %v1175
      %1179 = vrot.lane.b32.xlu0 %v1161, 126
      %v1180 = vpop.permute.xlu0 %1179
      %1181 = vrot.lane.b32.xlu0 %v1176, 126
      %v1182 = vpop.permute.xlu0 %1181
      %v1185 = vmul.f32 %v1137, %v1180
      %v1186 = vmul.f32 %v1138, %v1182
      %v1187 = vsub.f32 1.0, %v1161
      %v1188 = vsub.f32 1.0, %v1176
      %1191 = vrot.lane.b32.xlu0 %v1187, 1
      %v1192 = vpop.permute.xlu0 %1191
      %1193 = vrot.lane.b32.xlu0 %v1188, 1
      %v1194 = vpop.permute.xlu0 %1193
      %v1197 = vmul.f32 %v414, %v1192
      %v1198 = vmul.f32 %v415, %v1194
      %1201 = vrot.lane.b32.xlu0 %v1197, 125
      %v1202 = vpop.permute.xlu0 %1201
      %1203 = vrot.lane.b32.xlu0 %v1198, 125
      %v1204 = vpop.permute.xlu0 %1203
      %v1207 = vadd.f32 %v1185, %v1202
      %v1208 = vadd.f32 %v1186, %v1204
      %v1209 = vtanh.pop %v1207
      %v1210 = vtanh.pop %v1208
      %1212 = vset.pattern.permute.xlu0 0
      %1213 = vperm.xlu0 %1212, %v1209
      %v1214 = vpop.permute.xlu0 %1213
      %1217 = vset.pattern.permute.xlu0 0
      %1218 = vperm.xlu0 %1217, %v1210
      %v1219 = vpop.permute.xlu0 %1218
      %1221 = vst [vmem:[%s217] sm:$0xff] %v1214
      %1222 = vst [vmem:[%s217 + $0x8] sm:$0xff] %v1219
      %p1223 = scmp.lt.s32.totalorder %s15, 1
      %s1224 = scalar_select %p1223, %s15, 1
      %s1225 = smul.addr %s1224, 2
      %s1226 = smul.addr %s1225, 8
      %s1227 = scalar_lea.vmem %s4, %s1226
      // Predicated region
      $region37: #{my_sag_pooling.1} parent=35 // pred_check
        %p1228 = pneg %p127
      $region38: #{my_sag_pooling.1} parent=35 // pred_check_branch
        %1230 = sbr.rel (%p1228) target = $region40
      $region39: #{my_sag_pooling.1} parent=35 // pred_region
        _
      $region40: #{my_sag_pooling.1} parent=35 // pred_fallthru
        _
    $region36: #{my_sag_pooling.1} parent=5 // pred_fallthru
      _
    %p1231 = scmp.le.s32.totalorder 2, %s10
    // Predicated region
    $region41: #{my_sag_pooling.1} parent=5 // pred_check
      %p1232 = pneg %p1231
    $region42: #{my_sag_pooling.1} parent=5 // pred_check_branch
      %1234 = sbr.rel (%p1232) target = $region44
    $region43: #{my_sag_pooling.1} parent=5 // pred_region
      %s1235 = ssub.s32 %s10, 2
      // Predicated region
      $region45: #{my_sag_pooling.1} parent=43 // pred_check
        %p1236 = pneg %p133
      $region46: #{my_sag_pooling.1} parent=43 // pred_check_branch
        %1238 = sbr.rel (%p1236) target = $region48
      $region47: #{my_sag_pooling.1} parent=43 // pred_region
        %p1239 = scmp.lt.s32.totalorder %s16, 1
        %s1240 = scalar_select %p1239, %s16, 1
        %s1241 = smul.addr %s1240, 2
        %s1242 = smul.addr %s1241, 8
        %s1243 = scalar_lea.vmem %s4, %s1242
      $region48: #{my_sag_pooling.1} parent=43 // pred_fallthru
        _
    $region44: #{my_sag_pooling.1} parent=5 // pred_fallthru
      _
  $region6: #{my_sag_pooling.1} parent=0 // loop_footer
    %s14 = sadd.s32 1, %s10
  $region7: #{my_sag_pooling.1} parent=0 // loop_footer_branch
    %9 = sbr.rel target = $region3
  $region8: #{my_sag_pooling.1} parent=0 // loop_exit
    _

</llo_original>
